<compile_context>
chip_gen: v7x
topology: tpu7x:2x2x1
jax: 0.10.0
libtpu: 0.0.40
codegen_flags: <defaults>
</compile_context>

<pallas_src>
import numpy as np
import jax
import jax.numpy as jnp
from jax import lax
from jax.experimental import pallas as pl
from jax.experimental.pallas import tpu as pltpu

# ----------------------------- configuration -----------------------------------
BATCH = 2
SEQ_LEN = 32          # configs.seq_len
ENC_IN = 4            # configs.enc_in
D_MODEL = 32          # configs.d_model
C_OUT = 4             # configs.c_out
KERNEL_SIZE = 16
PAD = 8
STRIDE = 2
POOL_K = 2
FREQ_LEN = SEQ_LEN // 2 + 1
L1 = (FREQ_LEN + 2 * PAD - KERNEL_SIZE) // STRIDE + 1     # conv1d output length (9)
L2 = (L1 - POOL_K) // STRIDE + 1                          # maxpool output length (4)
LN_EPS = 1e-5

L_USED = 2 * L2                  # conv positions actually consumed by the pool (8)
BS = BATCH * SEQ_LEN             # 64
PB = L2 * BATCH                  # fused-matmul output rows (pool_pos, batch) = 8
XCOLS = SEQ_LEN * ENC_IN         # flattened (s, c) contraction dim per pool position = 128
KDIM = L2 * XCOLS                # fused operator rows = 512
SLAB_ROWS = 72                   # packed-constant slab rows (padded to a multiple of 8)

# slab layout (all f32, last dim = 128 lanes)
COL_WM = 0                       # [0:64, 0:64]    mlp1|mlp2 weight  (64 x 64)
COL_WH = 2 * D_MODEL             # [0:64, 64:80]   block-diag head weight (64 x 16)
COL_WP = COL_WH + 2 * L2 * BATCH  # [0:32, 80:84]   projection weight (32 x 4)
COL_BH = COL_WP + C_OUT          # [0:64, 84:85]   head bias column (64 x 1)
ROW_BIAS0 = BS                   # row 64: conv_b_real | conv_b_imag | ln_gamma | ln_beta
ROW_BIAS1 = BS + 1               # row 65: mlp bias (b1|b2, 64) | proj bias (4)


# ----------------------------------- kernel -------------------------------------
def rsn_kernel(x_ref, wf_ref, slab_ref, out_ref, big_ref):
    f32 = jnp.float32
    dot = lambda a, b: jnp.dot(a, b, preferred_element_type=f32)
    D = D_MODEL

    slab = slab_ref[...]                                     # [72, 128] packed f32 constants

    # (1) rfft-as-DFT + Conv1d(pad/stride) + even/odd pool grouping folded host-side into the
    #     bf16 operator wf.  x stays [B, S*C]; one [2,128]x[128,128] bf16 dot per pool
    #     position p (no kron, no structural-zero MACs), assembled into a [8,128] scratch.
    xb = x_ref[...].astype(jnp.bfloat16)                     # [2, 128]
    for p in range(L2):                                      # unrolled, static slices
        big_ref[p * BATCH:(p + 1) * BATCH, :] = dot(
            xb, wf_ref[p * XCOLS:(p + 1) * XCOLS, :])        # [2, 128] f32
    big = big_ref[...]                                       # [8, 128]  rows = (p, b)

    # (2) MaxPool1d(2,2) folded through the monotone tanh: max over the parity halves.
    pooled = jnp.maximum(big[:, 0:2 * D], big[:, 2 * D:4 * D])   # [8, 64] = [real_d | imag_d]
    b_ri = slab[ROW_BIAS0:ROW_BIAS0 + 1, 0:2 * D]            # [1, 64] = [conv_b_r | conv_b_i]
    xc = jnp.tanh(pooled + b_ri)                             # mlp input  [8, 64]

    # (3) mlp1 + mlp2 merged into a single [2D, 2D] matmul (f32 weights).
    wm = slab[0:2 * D, COL_WM:COL_WM + 2 * D]                # [64, 64]
    bm = slab[ROW_BIAS1:ROW_BIAS1 + 1, 0:2 * D]              # [1, 64]
    mm = jnp.tanh(dot(xc, wm) + bm)                          # [8, 64]
    r = mm[:, 0:D]
    im = mm[:, D:2 * D]

    # (4) Restricted-sparse gating; softmax over d_model (lane axis); divide on the EUP.
    A = -2.0 * r
    Bq = r * r + im * im
    Z = A * A - Bq
    Z = Z - jnp.max(Z, axis=-1, keepdims=True)
    Ze = jnp.exp(Z)
    Z = Ze * pl.reciprocal(jnp.sum(Ze, axis=-1, keepdims=True), approx=True)
    A = A * Z
    Bq = Bq * Z
    r_new = A * Bq + (A * A - Bq) * r
    i_new = (A * A - Bq) * im

    # (5) LayerNorm over d_model per half; dec stays split as two [8,32] tiles
    #     (no sublane concatenate / relayout in the epilogue).
    lng = slab[ROW_BIAS0:ROW_BIAS0 + 1, 2 * D:3 * D]
    lnb = slab[ROW_BIAS0:ROW_BIAS0 + 1, 3 * D:4 * D]

    def layer_norm(v):
        mu = jnp.mean(v, axis=-1, keepdims=True)
        var = jnp.mean((v - mu) ** 2, axis=-1, keepdims=True)
        return (v - mu) * lax.rsqrt(var + LN_EPS) * lng + lnb

    dec_r = layer_norm(r_new)                                # [8, 32]
    dec_i = layer_norm(i_new)                                # [8, 32]

    # (6) head Linear(2*L2 -> seq_len) + ReLU, as two block-diag dots (real/imag halves).
    wh_r = slab[0:BS, COL_WH:COL_WH + PB]                    # [64, 8]
    wh_i = slab[0:BS, COL_WH + PB:COL_WH + 2 * PB]           # [64, 8]
    bh = slab[0:BS, COL_BH:COL_BH + 1]                       # [64, 1]
    h = jnp.maximum(dot(wh_r, dec_r) + dot(wh_i, dec_i) + bh, 0.0)   # [64, 32]

    # (7) projection (OutputBlock): pointwise Linear(d_model -> c_out); dropout == identity.
    # TODO(synk): OutputBlock source not given; approximated as a pointwise linear head.
    wp = slab[0:D, COL_WP:COL_WP + C_OUT]                    # [32, 4]
    bp = slab[ROW_BIAS1:ROW_BIAS1 + 1, 2 * D:2 * D + C_OUT]  # [1, 4]
    out_ref[...] = (dot(h, wp) + bp).astype(out_ref.dtype)


# --------------------------------- wrapper --------------------------------------
def _rsn_forward(x_enc, w_fused, slab):
    assert x_enc.shape == (BATCH, SEQ_LEN, ENC_IN)
    x_flat = x_enc.reshape(BATCH, SEQ_LEN * ENC_IN).astype(jnp.float32)     # [2, 128]
    vmem = pltpu.MemorySpace.VMEM
    out = pl.pallas_call(
        rsn_kernel,
        out_shape=jax.ShapeDtypeStruct((BS, C_OUT), jnp.float32),
        in_specs=[pl.BlockSpec(memory_space=vmem),
                  pl.BlockSpec(memory_space=vmem),
                  pl.BlockSpec(memory_space=vmem)],
        out_specs=pl.BlockSpec(memory_space=vmem),
        scratch_shapes=[pltpu.VMEM((PB, 4 * D_MODEL), jnp.float32)],
    )(x_flat, w_fused, slab)
    return out.reshape(BATCH, SEQ_LEN, C_OUT)


rsn_forward = jax.jit(_rsn_forward)


# -------------------------- host-side constant folding ---------------------------
def build_fused_operator(Wr, Wi):
    """[L2*S*C, 2*2*D] operator: rfft -> Conv1d(pad,stride) -> even/odd pool grouping."""
    sel = np.zeros((KERNEL_SIZE, L_USED, FREQ_LEN))
    for k in range(KERNEL_SIZE):
        for l in range(L_USED):
            src = STRIDE * l + k - PAD
            if 0 <= src < FREQ_LEN:
                sel[k, l, src] = 1.0
    t = np.arange(SEQ_LEN)
    f = np.arange(FREQ_LEN)
    ang = 2.0 * np.pi * np.outer(f, t) / SEQ_LEN
    dfts = [np.cos(ang), -np.sin(ang)]                       # real / imag DFT rows [F, S]
    mats = []
    for dft, W in zip(dfts, (Wr, Wi)):
        taps = np.einsum('klf,fs->kls', sel, dft)            # [K, L_USED, S]
        mats.append(np.einsum('kls,dck->scld', taps, np.asarray(W, np.float64)))  # [S,C,L,D]
    m = np.stack(mats, axis=-2)                              # [S, C, L_USED, 2(branch), D]
    m = m.reshape(SEQ_LEN, ENC_IN, L2, 2, 2, D_MODEL)        # [S, C, p, parity, branch, D]
    m = m.transpose(2, 0, 1, 3, 4, 5)                        # [p, S, C, parity, branch, D]
    return m.reshape(KDIM, 4 * D_MODEL).astype(np.float32)   # [512, 128]


def build_slab(P):
    slab = np.zeros((SLAB_ROWS, 128), np.float32)
    W1 = np.asarray(P['W1'])
    W2 = np.asarray(P['W2'])
    slab[0:2 * D_MODEL, COL_WM:COL_WM + 2 * D_MODEL] = np.concatenate([W1.T, W2.T], axis=1)

    Wh = np.asarray(P['Wh'])                                 # [S, 2*L2]
    wh_full = np.zeros((BS, 2 * L2 * BATCH), np.float32)
    for b in range(BATCH):
        rows = slice(b * SEQ_LEN, (b + 1) * SEQ_LEN)
        for p in range(L2):
            wh_full[rows, p * BATCH + b] = Wh[:, p]                     # real part
            wh_full[rows, L2 * BATCH + p * BATCH + b] = Wh[:, L2 + p]   # imag part
    slab[0:BS, COL_WH:COL_WH + 2 * L2 * BATCH] = wh_full

    slab[0:D_MODEL, COL_WP:COL_WP + C_OUT] = np.asarray(P['Wp']).T
    slab[0:BS, COL_BH] = np.tile(np.asarray(P['bh']), BATCH)

    slab[ROW_BIAS0, 0:D_MODEL] = np.asarray(P['br'])
    slab[ROW_BIAS0, D_MODEL:2 * D_MODEL] = np.asarray(P['bi'])
    slab[ROW_BIAS0, 2 * D_MODEL:3 * D_MODEL] = np.asarray(P['lng'])
    slab[ROW_BIAS0, 3 * D_MODEL:4 * D_MODEL] = np.asarray(P['lnb'])
    slab[ROW_BIAS1, 0:2 * D_MODEL] = np.concatenate([np.asarray(P['b1']), np.asarray(P['b2'])])
    slab[ROW_BIAS1, 2 * D_MODEL:2 * D_MODEL + C_OUT] = np.asarray(P['bp'])
    return slab


# ------------------------------ pure-JAX reference -------------------------------
def rsn_reference(x_enc, P):
    xf = jnp.fft.rfft(x_enc, axis=1)
    xr = jnp.real(xf).astype(jnp.float32)
    xi = jnp.imag(xf).astype(jnp.float32)

    def branch(inp, W, b):
        inp = jnp.transpose(inp, (0, 2, 1))                 # [B, C, F]
        out = jax.lax.conv_general_dilated(
            inp, W, window_strides=(STRIDE,), padding=[(PAD, PAD)],
            dimension_numbers=('NCH', 'OIH', 'NCH'))
        out = jnp.tanh(out + b[None, :, None])              # [B, D, L1]
        return jnp.maximum(out[..., 0:STRIDE * L2:STRIDE],
                           out[..., 1:STRIDE * L2:STRIDE])  # [B, D, L2]

    pr = branch(xr, P['Wr'], P['br'])
    pi = branch(xi, P['Wi'], P['bi'])
    x_comb = jnp.transpose(jnp.concatenate([pr, pi], axis=1), (0, 2, 1))   # [B, L2, 2D]
    r = jnp.tanh(x_comb @ P['W1'].T + P['b1'])
    im = jnp.tanh(x_comb @ P['W2'].T + P['b2'])
    A = -2.0 * r
    Bq = r ** 2 + im ** 2
    Z = jax.nn.softmax(A ** 2 - Bq, axis=-1)
    A = A * Z
    Bq = Bq * Z
    r2 = A * Bq + (A ** 2 - Bq) * r
    i2 = (A ** 2 - Bq) * im
    dec = jnp.concatenate([r2, i2], axis=1)                 # [B, 2*L2, D]
    mu = dec.mean(-1, keepdims=True)
    var = ((dec - mu) ** 2).mean(-1, keepdims=True)
    dec = (dec - mu) * jax.lax.rsqrt(var + LN_EPS) * P['lng'] + P['lnb']
    h = jnp.einsum('sp,bpd->bsd', P['Wh'], dec) + P['bh'][None, :, None]
    h = jnp.maximum(h, 0.0)
    return h @ P['Wp'].T + P['bp']


# ----------------------------------- main ----------------------------------------
if __name__ == "__main__":
    key = jax.random.PRNGKey(0)
    ks = jax.random.split(key, 16)
    init = lambda k, shape, s=0.1: (s * jax.random.normal(k, shape)).astype(jnp.float32)

    P = {
        'Wr': init(ks[0], (D_MODEL, ENC_IN, KERNEL_SIZE)),
        'br': init(ks[1], (D_MODEL,), 0.02),
        'Wi': init(ks[2], (D_MODEL, ENC_IN, KERNEL_SIZE)),
        'bi': init(ks[3], (D_MODEL,), 0.02),
        'W1': init(ks[4], (D_MODEL, 2 * D_MODEL)),
        'b1': init(ks[5], (D_MODEL,), 0.02),
        'W2': init(ks[6], (D_MODEL, 2 * D_MODEL)),
        'b2': init(ks[7], (D_MODEL,), 0.02),
        'lng': jnp.ones((D_MODEL,), jnp.float32),
        'lnb': jnp.zeros((D_MODEL,), jnp.float32),
        'Wh': init(ks[8], (SEQ_LEN, 2 * L2)),
        'bh': init(ks[9], (SEQ_LEN,), 0.02),
        'Wp': init(ks[10], (C_OUT, D_MODEL)),
        'bp': init(ks[11], (C_OUT,), 0.02),
    }

    # fused DFT+conv+pool operator in bf16 (dominant byte-mover); small constants stay f32.
    w_fused = jnp.asarray(build_fused_operator(np.asarray(P['Wr']), np.asarray(P['Wi'])),
                          dtype=jnp.bfloat16)
    slab = jnp.asarray(build_slab(P))

    x_enc = jax.random.normal(ks[12], (BATCH, SEQ_LEN, ENC_IN), dtype=jnp.float32)

    out = rsn_forward(x_enc, w_fused, slab)
    out = jax.block_until_ready(out)

    ref = jax.block_until_ready(rsn_reference(x_enc, P))
    assert out.shape == (BATCH, SEQ_LEN, C_OUT)
    np.testing.assert_allclose(np.asarray(out), np.asarray(ref), rtol=2e-2, atol=2e-2)

    print("KERNEL_OK")
</pallas_src>

<mosaic_0001>
module attributes {stable_mosaic.version = 11 : i64} {
  func.func @rsn_kernel(%arg0: memref<2x128xf32, #tpu.memory_space<vmem>>, %arg1: memref<512x128xbf16, #tpu.memory_space<vmem>>, %arg2: memref<72x128xf32, #tpu.memory_space<vmem>>, %arg3: memref<64x4xf32, #tpu.memory_space<vmem>>, %arg4: memref<8x128xf32, #tpu.memory_space<vmem>>) attributes {dimension_semantics = [], scalar_prefetch = 0 : i64, scratch_operands = 1 : i64, tpu.core_type = #tpu.core_type<tc>} {
    %c0 = arith.constant 0 : index
    %c0_0 = arith.constant 0 : index
    %0 = vector.load %arg2[%c0, %c0_0] : memref<72x128xf32, #tpu.memory_space<vmem>>, vector<72x128xf32>
    %c0_1 = arith.constant 0 : index
    %c0_2 = arith.constant 0 : index
    %1 = vector.load %arg0[%c0_1, %c0_2] : memref<2x128xf32, #tpu.memory_space<vmem>>, vector<2x128xf32>
    %2 = arith.truncf %1 : vector<2x128xf32> to vector<2x128xbf16>
    %c0_3 = arith.constant 0 : index
    %c0_4 = arith.constant 0 : index
    %3 = vector.load %arg1[%c0_3, %c0_4] : memref<512x128xbf16, #tpu.memory_space<vmem>>, vector<128x128xbf16>
    %cst = arith.constant dense<0.000000e+00> : vector<2x128xf32>
    %4 = tpu.matmul %2, %3, %cst {dimension_numbers = #tpu.dot_dimension_numbers<[1], [0], [0], [1], [0, 0, 1, 1], [], []>} : vector<2x128xbf16>, vector<128x128xbf16>, vector<2x128xf32> -> vector<2x128xf32>
    %c0_5 = arith.constant 0 : index
    %c0_6 = arith.constant 0 : index
    %5 = vector.load %arg4[%c0_5, %c0_6] : memref<8x128xf32, #tpu.memory_space<vmem>>, vector<2x128xf32>
    tpu.vector_store %arg4[%c0_5, %c0_6], %4 {strides = array<i32>} : memref<8x128xf32, #tpu.memory_space<vmem>>, vector<2x128xf32>,
    %c128 = arith.constant 128 : index
    %c0_7 = arith.constant 0 : index
    %6 = vector.load %arg1[%c128, %c0_7] : memref<512x128xbf16, #tpu.memory_space<vmem>>, vector<128x128xbf16>
    %cst_8 = arith.constant dense<0.000000e+00> : vector<2x128xf32>
    %7 = tpu.matmul %2, %6, %cst_8 {dimension_numbers = #tpu.dot_dimension_numbers<[1], [0], [0], [1], [0, 0, 1, 1], [], []>} : vector<2x128xbf16>, vector<128x128xbf16>, vector<2x128xf32> -> vector<2x128xf32>
    %c2 = arith.constant 2 : index
    %c0_9 = arith.constant 0 : index
    %8 = vector.load %arg4[%c2, %c0_9] : memref<8x128xf32, #tpu.memory_space<vmem>>, vector<2x128xf32>
    tpu.vector_store %arg4[%c2, %c0_9], %7 {strides = array<i32>} : memref<8x128xf32, #tpu.memory_space<vmem>>, vector<2x128xf32>,
    %c256 = arith.constant 256 : index
    %c0_10 = arith.constant 0 : index
    %9 = vector.load %arg1[%c256, %c0_10] : memref<512x128xbf16, #tpu.memory_space<vmem>>, vector<128x128xbf16>
    %cst_11 = arith.constant dense<0.000000e+00> : vector<2x128xf32>
    %10 = tpu.matmul %2, %9, %cst_11 {dimension_numbers = #tpu.dot_dimension_numbers<[1], [0], [0], [1], [0, 0, 1, 1], [], []>} : vector<2x128xbf16>, vector<128x128xbf16>, vector<2x128xf32> -> vector<2x128xf32>
    %c4 = arith.constant 4 : index
    %c0_12 = arith.constant 0 : index
    %11 = vector.load %arg4[%c4, %c0_12] : memref<8x128xf32, #tpu.memory_space<vmem>>, vector<2x128xf32>
    tpu.vector_store %arg4[%c4, %c0_12], %10 {strides = array<i32>} : memref<8x128xf32, #tpu.memory_space<vmem>>, vector<2x128xf32>,
    %c384 = arith.constant 384 : index
    %c0_13 = arith.constant 0 : index
    %12 = vector.load %arg1[%c384, %c0_13] : memref<512x128xbf16, #tpu.memory_space<vmem>>, vector<128x128xbf16>
    %cst_14 = arith.constant dense<0.000000e+00> : vector<2x128xf32>
    %13 = tpu.matmul %2, %12, %cst_14 {dimension_numbers = #tpu.dot_dimension_numbers<[1], [0], [0], [1], [0, 0, 1, 1], [], []>} : vector<2x128xbf16>, vector<128x128xbf16>, vector<2x128xf32> -> vector<2x128xf32>
    %c6 = arith.constant 6 : index
    %c0_15 = arith.constant 0 : index
    %14 = vector.load %arg4[%c6, %c0_15] : memref<8x128xf32, #tpu.memory_space<vmem>>, vector<2x128xf32>
    tpu.vector_store %arg4[%c6, %c0_15], %13 {strides = array<i32>} : memref<8x128xf32, #tpu.memory_space<vmem>>, vector<2x128xf32>,
    %c0_16 = arith.constant 0 : index
    %c0_17 = arith.constant 0 : index
    %15 = vector.load %arg4[%c0_16, %c0_17] : memref<8x128xf32, #tpu.memory_space<vmem>>, vector<8x128xf32>
    %16 = vector.extract_strided_slice %15 {offsets = [0, 0], sizes = [8, 64], strides = [1, 1]} : vector<8x128xf32> to vector<8x64xf32>
    %17 = vector.extract_strided_slice %15 {offsets = [0, 64], sizes = [8, 64], strides = [1, 1]} : vector<8x128xf32> to vector<8x64xf32>
    %18 = arith.maximumf %16, %17 : vector<8x64xf32>
    %19 = vector.extract_strided_slice %0 {offsets = [64, 0], sizes = [1, 64], strides = [1, 1]} : vector<72x128xf32> to vector<1x64xf32>
    %20 = vector.broadcast %19 : vector<1x64xf32> to vector<8x64xf32>
    %21 = arith.addf %18, %20 : vector<8x64xf32>
    %22 = math.tanh %21 : vector<8x64xf32>
    %23 = vector.extract_strided_slice %0 {offsets = [0, 0], sizes = [64, 64], strides = [1, 1]} : vector<72x128xf32> to vector<64x64xf32>
    %24 = vector.extract_strided_slice %0 {offsets = [65, 0], sizes = [1, 64], strides = [1, 1]} : vector<72x128xf32> to vector<1x64xf32>
    %cst_18 = arith.constant dense<0.000000e+00> : vector<8x64xf32>
    %25 = tpu.matmul %22, %23, %cst_18 {dimension_numbers = #tpu.dot_dimension_numbers<[1], [0], [0], [1], [0, 0, 1, 1], [], []>} : vector<8x64xf32>, vector<64x64xf32>, vector<8x64xf32> -> vector<8x64xf32>
    %26 = vector.broadcast %24 : vector<1x64xf32> to vector<8x64xf32>
    %27 = arith.addf %25, %26 : vector<8x64xf32>
    %28 = math.tanh %27 : vector<8x64xf32>
    %29 = vector.extract_strided_slice %28 {offsets = [0, 0], sizes = [8, 32], strides = [1, 1]} : vector<8x64xf32> to vector<8x32xf32>
    %30 = vector.extract_strided_slice %28 {offsets = [0, 32], sizes = [8, 32], strides = [1, 1]} : vector<8x64xf32> to vector<8x32xf32>
    %cst_19 = arith.constant -2.000000e+00 : f32
    %31 = vector.broadcast %cst_19 : f32 to vector<8x32xf32>
    %32 = arith.mulf %31, %29 : vector<8x32xf32>
    %33 = arith.mulf %29, %29 : vector<8x32xf32>
    %34 = arith.mulf %30, %30 : vector<8x32xf32>
    %35 = arith.addf %33, %34 : vector<8x32xf32>
    %36 = arith.mulf %32, %32 : vector<8x32xf32>
    %37 = arith.subf %36, %35 : vector<8x32xf32>
    %cst_20 = arith.constant dense<0xFF800000> : vector<8xf32>
    %38 = vector.multi_reduction <maximumf>, %37, %cst_20 [1] : vector<8x32xf32> to vector<8xf32>
    %39 = vector.shape_cast %38 : vector<8xf32> to vector<8x1xf32>
    %40 = vector.broadcast %39 : vector<8x1xf32> to vector<8x32xf32>
    %41 = arith.subf %37, %40 : vector<8x32xf32>
    %42 = math.exp %41 : vector<8x32xf32>
    %cst_21 = arith.constant dense<0.000000e+00> : vector<8xf32>
    %43 = vector.multi_reduction <add>, %42, %cst_21 [1] : vector<8x32xf32> to vector<8xf32>
    %44 = vector.shape_cast %43 : vector<8xf32> to vector<8x1xf32>
    %45 = tpu.reciprocal %44 {approx = true} : vector<8x1xf32> -> vector<8x1xf32>
    %46 = vector.broadcast %45 : vector<8x1xf32> to vector<8x32xf32>
    %47 = arith.mulf %42, %46 : vector<8x32xf32>
    %48 = arith.mulf %32, %47 : vector<8x32xf32>
    %49 = arith.mulf %35, %47 : vector<8x32xf32>
    %50 = arith.mulf %48, %49 : vector<8x32xf32>
    %51 = arith.mulf %48, %48 : vector<8x32xf32>
    %52 = arith.subf %51, %49 : vector<8x32xf32>
    %53 = arith.mulf %52, %29 : vector<8x32xf32>
    %54 = arith.addf %50, %53 : vector<8x32xf32>
    %55 = arith.mulf %48, %48 : vector<8x32xf32>
    %56 = arith.subf %55, %49 : vector<8x32xf32>
    %57 = arith.mulf %56, %30 : vector<8x32xf32>
    %58 = vector.extract_strided_slice %0 {offsets = [64, 64], sizes = [1, 32], strides = [1, 1]} : vector<72x128xf32> to vector<1x32xf32>
    %59 = vector.extract_strided_slice %0 {offsets = [64, 96], sizes = [1, 32], strides = [1, 1]} : vector<72x128xf32> to vector<1x32xf32>
    %cst_22 = arith.constant dense<0.000000e+00> : vector<8xf32>
    %60 = vector.multi_reduction <add>, %54, %cst_22 [1] : vector<8x32xf32> to vector<8xf32>
    %61 = vector.shape_cast %60 : vector<8xf32> to vector<8x1xf32>
    %cst_23 = arith.constant 3.200000e+01 : f32
    %62 = vector.broadcast %cst_23 : f32 to vector<8x1xf32>
    %63 = arith.divf %61, %62 : vector<8x1xf32>
    %64 = vector.broadcast %63 : vector<8x1xf32> to vector<8x32xf32>
    %65 = arith.subf %54, %64 : vector<8x32xf32>
    %66 = arith.mulf %65, %65 : vector<8x32xf32>
    %cst_24 = arith.constant dense<0.000000e+00> : vector<8xf32>
    %67 = vector.multi_reduction <add>, %66, %cst_24 [1] : vector<8x32xf32> to vector<8xf32>
    %68 = vector.shape_cast %67 : vector<8xf32> to vector<8x1xf32>
    %cst_25 = arith.constant 3.200000e+01 : f32
    %69 = vector.broadcast %cst_25 : f32 to vector<8x1xf32>
    %70 = arith.divf %68, %69 : vector<8x1xf32>
    %71 = vector.broadcast %63 : vector<8x1xf32> to vector<8x32xf32>
    %72 = arith.subf %54, %71 : vector<8x32xf32>
    %cst_26 = arith.constant 9.99999974E-6 : f32
    %73 = vector.broadcast %cst_26 : f32 to vector<8x1xf32>
    %74 = arith.addf %70, %73 : vector<8x1xf32>
    %75 = math.rsqrt %74 : vector<8x1xf32>
    %76 = vector.broadcast %75 : vector<8x1xf32> to vector<8x32xf32>
    %77 = arith.mulf %72, %76 : vector<8x32xf32>
    %78 = vector.broadcast %58 : vector<1x32xf32> to vector<8x32xf32>
    %79 = arith.mulf %77, %78 : vector<8x32xf32>
    %80 = vector.broadcast %59 : vector<1x32xf32> to vector<8x32xf32>
    %81 = arith.addf %79, %80 : vector<8x32xf32>
    %cst_27 = arith.constant dense<0.000000e+00> : vector<8xf32>
    %82 = vector.multi_reduction <add>, %57, %cst_27 [1] : vector<8x32xf32> to vector<8xf32>
    %83 = vector.shape_cast %82 : vector<8xf32> to vector<8x1xf32>
    %cst_28 = arith.constant 3.200000e+01 : f32
    %84 = vector.broadcast %cst_28 : f32 to vector<8x1xf32>
    %85 = arith.divf %83, %84 : vector<8x1xf32>
    %86 = vector.broadcast %85 : vector<8x1xf32> to vector<8x32xf32>
    %87 = arith.subf %57, %86 : vector<8x32xf32>
    %88 = arith.mulf %87, %87 : vector<8x32xf32>
    %cst_29 = arith.constant dense<0.000000e+00> : vector<8xf32>
    %89 = vector.multi_reduction <add>, %88, %cst_29 [1] : vector<8x32xf32> to vector<8xf32>
    %90 = vector.shape_cast %89 : vector<8xf32> to vector<8x1xf32>
    %cst_30 = arith.constant 3.200000e+01 : f32
    %91 = vector.broadcast %cst_30 : f32 to vector<8x1xf32>
    %92 = arith.divf %90, %91 : vector<8x1xf32>
    %93 = vector.broadcast %85 : vector<8x1xf32> to vector<8x32xf32>
    %94 = arith.subf %57, %93 : vector<8x32xf32>
    %cst_31 = arith.constant 9.99999974E-6 : f32
    %95 = vector.broadcast %cst_31 : f32 to vector<8x1xf32>
    %96 = arith.addf %92, %95 : vector<8x1xf32>
    %97 = math.rsqrt %96 : vector<8x1xf32>
    %98 = vector.broadcast %97 : vector<8x1xf32> to vector<8x32xf32>
    %99 = arith.mulf %94, %98 : vector<8x32xf32>
    %100 = vector.broadcast %58 : vector<1x32xf32> to vector<8x32xf32>
    %101 = arith.mulf %99, %100 : vector<8x32xf32>
    %102 = vector.broadcast %59 : vector<1x32xf32> to vector<8x32xf32>
    %103 = arith.addf %101, %102 : vector<8x32xf32>
    %104 = vector.extract_strided_slice %0 {offsets = [0, 64], sizes = [64, 8], strides = [1, 1]} : vector<72x128xf32> to vector<64x8xf32>
    %105 = vector.extract_strided_slice %0 {offsets = [0, 72], sizes = [64, 8], strides = [1, 1]} : vector<72x128xf32> to vector<64x8xf32>
    %106 = vector.extract_strided_slice %0 {offsets = [0, 84], sizes = [64, 1], strides = [1, 1]} : vector<72x128xf32> to vector<64x1xf32>
    %cst_32 = arith.constant dense<0.000000e+00> : vector<64x32xf32>
    %107 = tpu.matmul %104, %81, %cst_32 {dimension_numbers = #tpu.dot_dimension_numbers<[1], [0], [0], [1], [0, 0, 1, 1], [], []>} : vector<64x8xf32>, vector<8x32xf32>, vector<64x32xf32> -> vector<64x32xf32>
    %cst_33 = arith.constant dense<0.000000e+00> : vector<64x32xf32>
    %108 = tpu.matmul %105, %103, %cst_33 {dimension_numbers = #tpu.dot_dimension_numbers<[1], [0], [0], [1], [0, 0, 1, 1], [], []>} : vector<64x8xf32>, vector<8x32xf32>, vector<64x32xf32> -> vector<64x32xf32>
    %109 = arith.addf %107, %108 : vector<64x32xf32>
    %110 = vector.broadcast %106 : vector<64x1xf32> to vector<64x32xf32>
    %111 = arith.addf %109, %110 : vector<64x32xf32>
    %cst_34 = arith.constant 0.000000e+00 : f32
    %112 = vector.broadcast %cst_34 : f32 to vector<64x32xf32>
    %113 = arith.maximumf %111, %112 : vector<64x32xf32>
    %114 = vector.extract_strided_slice %0 {offsets = [0, 80], sizes = [32, 4], strides = [1, 1]} : vector<72x128xf32> to vector<32x4xf32>
    %115 = vector.extract_strided_slice %0 {offsets = [65, 64], sizes = [1, 4], strides = [1, 1]} : vector<72x128xf32> to vector<1x4xf32>
    %cst_35 = arith.constant dense<0.000000e+00> : vector<64x4xf32>
    %116 = tpu.matmul %113, %114, %cst_35 {dimension_numbers = #tpu.dot_dimension_numbers<[1], [0], [0], [1], [0, 0, 1, 1], [], []>} : vector<64x32xf32>, vector<32x4xf32>, vector<64x4xf32> -> vector<64x4xf32>
    %117 = vector.broadcast %115 : vector<1x4xf32> to vector<64x4xf32>
    %118 = arith.addf %116, %117 : vector<64x4xf32>
    %c0_36 = arith.constant 0 : index
    %c0_37 = arith.constant 0 : index
    %119 = vector.load %arg3[%c0_36, %c0_37] : memref<64x4xf32, #tpu.memory_space<vmem>>, vector<64x4xf32>
    tpu.vector_store %arg3[%c0_36, %c0_37], %118 {strides = array<i32>} : memref<64x4xf32, #tpu.memory_space<vmem>>, vector<64x4xf32>,
    return
  }
}

</mosaic_0001>

<llo_original>
// kernel: _rsn_forward.1
$region0: #{_rsn_forward.1}
  #allocation0 [shape = 'u32[]', space=smem, size = 0x4, offset = 0x4, fixed_abs, tag = 'smem constant byte address 0x4 - core index']
  #allocation1 [shape = 'u32[144,128]{1,0:T(1,128)}', space=vmem, size = 0x12000, scoped, tag = 'internal scratch']
  #allocation2 [shape = 'f32[8,128]{1,0:T(8,128)}', space=vmem, size = 0x1000, scoped, tag = 'scratch operand']
  %s0 = inlined_call_operand.vmem [shape: f32[2,128], index: 0, kind: input, shape index: {}]
  %s1 = inlined_call_operand.hbm [shape: bf16[512,128], index: 1, kind: input, shape index: {}]
  %s2 = inlined_call_operand.vmem [shape: f32[72,128], index: 2, kind: input, shape index: {}]
  %s3 = inlined_call_operand.vmem [shape: f32[64,4], index: 3, kind: output, shape index: {}]
  %s4 = sld [smem:[#allocation0]]
  $region26: #{_rsn_forward.1} parent=0
    _
  %s6 = ssub.s32 1, %s4
  %s7 = scalar_select 0, %s6, %s4
  $region1: #{_rsn_forward.1} parent=0
    #allocation3 [shape = 'u8[131072]{0}', space=vmem, size = 0x20000, scoped, tag = 'input window, operand 1, single buffered']
    #allocation4 [shape = 's32[1]{0}', space=sflag, size = 0x4, scoped, tag = 'scoped memory for _rsn_forward.1']
    %8 = vsyncpa [#allocation4], 0
    // Predicated region
    $region2: #{_rsn_forward.1} parent=1 // pred_check
      _
    $region3: #{_rsn_forward.1} parent=1 // pred_check_branch
      %10 = sbr.rel (0) target = $region5
    $region4: #{_rsn_forward.1} parent=1 // pred_region
      _
    $region5: #{_rsn_forward.1} parent=1 // pred_fallthru
      _
    // Predicated region
    $region6: #{_rsn_forward.1} parent=1 // pred_check
      _
    $region7: #{_rsn_forward.1} parent=1 // pred_check_branch
      %12 = sbr.rel (0) target = $region9
    $region8: #{_rsn_forward.1} parent=1 // pred_region
      %s14 = ssub.s32 4096, 4096
      %15 = vsyncadd [#allocation4], %s14
      %s16 = sshll.u32 [#allocation3], 4
      %s17 = int_to_ptr.vmem [resolvable:$true] %s16
      %22 = dma.hbm_to_vmem [thread:$0]  %s1, 4096, %s17, [#allocation4], 64, 64, 4
    $region9: #{_rsn_forward.1} parent=1 // pred_fallthru
      _
    // Predicated region
    $region10: #{_rsn_forward.1} parent=1 // pred_check
      _
    $region11: #{_rsn_forward.1} parent=1 // pred_check_branch
      %24 = sbr.rel (0) target = $region13
    $region12: #{_rsn_forward.1} parent=1 // pred_region
      _
    $region13: #{_rsn_forward.1} parent=1 // pred_fallthru
      _
    // Predicated region
    $region14: #{_rsn_forward.1} parent=1 // pred_check
      _
    $region15: #{_rsn_forward.1} parent=1 // pred_check_branch
      %26 = sbr.rel (0) target = $region17
    $region16: #{_rsn_forward.1} parent=1 // pred_region
      %27 = dma.done [#allocation4], 4096
    $region17: #{_rsn_forward.1} parent=1 // pred_fallthru
      _
    %v29 = vld [vmem:[%s2] sm:$0xff]
    %v30 = vld [vmem:[%s2 + $0x8] sm:$0xff]
    %v31 = vld [vmem:[%s2 + $0x10] sm:$0xff]
    %v32 = vld [vmem:[%s2 + $0x18] sm:$0xff]
    %v33 = vld [vmem:[%s2 + $0x20] sm:$0xff]
    %v34 = vld [vmem:[%s2 + $0x28] sm:$0xff]
    %v35 = vld [vmem:[%s2 + $0x30] sm:$0xff]
    %v36 = vld [vmem:[%s2 + $0x38] sm:$0xff]
    %v37 = vld [vmem:[%s2 + $0x40] sm:$0xff]
    %v38 = vld [vmem:[%s0] sm:$0x3]
    %v39 = vpack.c.bf16 %v38, %v38
    %v40 = vld [vmem:[#allocation3] sm:$0xf]
    %v41 = vld [vmem:[#allocation3 + $0x4] sm:$0xf]
    %v42 = vld [vmem:[#allocation3 + $0x8] sm:$0xf]
    %v43 = vld [vmem:[#allocation3 + $0xc] sm:$0xf]
    %v44 = vld [vmem:[#allocation3 + $0x10] sm:$0xf]
    %v45 = vld [vmem:[#allocation3 + $0x14] sm:$0xf]
    %v46 = vld [vmem:[#allocation3 + $0x18] sm:$0xf]
    %v47 = vld [vmem:[#allocation3 + $0x1c] sm:$0xf]
    %v48 = vld [vmem:[#allocation3 + $0x20] sm:$0xf]
    %v49 = vld [vmem:[#allocation3 + $0x24] sm:$0xf]
    %v50 = vld [vmem:[#allocation3 + $0x28] sm:$0xf]
    %v51 = vld [vmem:[#allocation3 + $0x2c] sm:$0xf]
    %v52 = vld [vmem:[#allocation3 + $0x30] sm:$0xf]
    %v53 = vld [vmem:[#allocation3 + $0x34] sm:$0xf]
    %v54 = vld [vmem:[#allocation3 + $0x38] sm:$0xf]
    %v55 = vld [vmem:[#allocation3 + $0x3c] sm:$0xf]
    %v72 = vunpack.c.l.b16 %v40
    %v73 = vunpack.c.l.b16 %v41
    %v74 = vunpack.c.l.b16 %v42
    %v75 = vunpack.c.l.b16 %v43
    %v76 = vunpack.c.l.b16 %v44
    %v77 = vunpack.c.l.b16 %v45
    %v78 = vunpack.c.l.b16 %v46
    %v79 = vunpack.c.l.b16 %v47
    %v80 = vunpack.c.l.b16 %v48
    %v81 = vunpack.c.l.b16 %v49
    %v82 = vunpack.c.l.b16 %v50
    %v83 = vunpack.c.l.b16 %v51
    %v84 = vunpack.c.l.b16 %v52
    %v85 = vunpack.c.l.b16 %v53
    %v86 = vunpack.c.l.b16 %v54
    %v87 = vunpack.c.l.b16 %v55
    %v88 = vpack.c.b16 %v73, %v72
    %v89 = vpack.c.b16 %v75, %v74
    %v90 = vpack.c.b16 %v77, %v76
    %v91 = vpack.c.b16 %v79, %v78
    %v92 = vpack.c.b16 %v81, %v80
    %v93 = vpack.c.b16 %v83, %v82
    %v94 = vpack.c.b16 %v85, %v84
    %v95 = vpack.c.b16 %v87, %v86
    %104 = vmatprep.subr.bf16.mxu0 0
    %105 = vmatpush1.bf16.msra.mxu0 %v88
    %106 = vmatprep.subr.bf16.mxu0 0
    %107 = vmatpush1.bf16.msra.mxu0 %v89
    %108 = vmatprep.subr.bf16.mxu0 0
    %109 = vmatpush1.bf16.msra.mxu0 %v90
    %110 = vmatprep.subr.bf16.mxu0 0
    %111 = vmatpush1.bf16.msra.mxu0 %v91
    %112 = vmatprep.subr.bf16.mxu0 0
    %113 = vmatpush1.bf16.msra.mxu0 %v92
    %114 = vmatprep.subr.bf16.mxu0 0
    %115 = vmatpush1.bf16.msra.mxu0 %v93
    %116 = vmatprep.subr.bf16.mxu0 0
    %117 = vmatpush1.bf16.msra.mxu0 %v94
    %118 = vmatprep.subr.bf16.mxu0 0
    %119 = vmatpush1.bf16.msra.mxu0 %v95
    %120 = vmatprep.subr.bf16.mxu0 0
    %121 = vmatpush1.bf16.msra.mxu0 0
    %122 = vmatprep.subr.bf16.mxu0 0
    %123 = vmatpush1.bf16.msra.mxu0 0
    %124 = vmatprep.subr.bf16.mxu0 0
    %125 = vmatpush1.bf16.msra.mxu0 0
    %126 = vmatprep.subr.bf16.mxu0 0
    %127 = vmatpush1.bf16.msra.mxu0 0
    %128 = vmatprep.subr.bf16.mxu0 0
    %129 = vmatpush1.bf16.msra.mxu0 0
    %130 = vmatprep.subr.bf16.mxu0 0
    %131 = vmatpush1.bf16.msra.mxu0 0
    %132 = vmatprep.subr.bf16.mxu0 0
    %133 = vmatpush1.bf16.msra.mxu0 0
    %134 = vmatprep.subr.bf16.mxu0 0
    %135 = vmatpush1.bf16.msra.mxu0 0
    %136 = vmatprep.mubr.bf16.mxu0 0
    %137 = vmatmul.mubr.bf16.gmra.mrb[0].mxu0 %v39
    %v138 = vpop.f32.mrb[0].mxu0
    %v139 = vadd.f32 0.0, %v138
    %v140 = vpop.f32.mrb[0].mxu0
    %v141 = vpop.f32.mrb[0].mxu0
    %v142 = vpop.f32.mrb[0].mxu0
    %143 = vdwg.mxu0
    %144 = vst [vmem:[#allocation2] sm:$0x3] %v139
    %v145 = vld [vmem:[#allocation3 + $0x40] sm:$0xf]
    %v146 = vld [vmem:[#allocation3 + $0x44] sm:$0xf]
    %v147 = vld [vmem:[#allocation3 + $0x48] sm:$0xf]
    %v148 = vld [vmem:[#allocation3 + $0x4c] sm:$0xf]
    %v149 = vld [vmem:[#allocation3 + $0x50] sm:$0xf]
    %v150 = vld [vmem:[#allocation3 + $0x54] sm:$0xf]
    %v151 = vld [vmem:[#allocation3 + $0x58] sm:$0xf]
    %v152 = vld [vmem:[#allocation3 + $0x5c] sm:$0xf]
    %v153 = vld [vmem:[#allocation3 + $0x60] sm:$0xf]
    %v154 = vld [vmem:[#allocation3 + $0x64] sm:$0xf]
    %v155 = vld [vmem:[#allocation3 + $0x68] sm:$0xf]
    %v156 = vld [vmem:[#allocation3 + $0x6c] sm:$0xf]
    %v157 = vld [vmem:[#allocation3 + $0x70] sm:$0xf]
    %v158 = vld [vmem:[#allocation3 + $0x74] sm:$0xf]
    %v159 = vld [vmem:[#allocation3 + $0x78] sm:$0xf]
    %v160 = vld [vmem:[#allocation3 + $0x7c] sm:$0xf]
    %v177 = vunpack.c.l.b16 %v145
    %v178 = vunpack.c.l.b16 %v146
    %v179 = vunpack.c.l.b16 %v147
    %v180 = vunpack.c.l.b16 %v148
    %v181 = vunpack.c.l.b16 %v149
    %v182 = vunpack.c.l.b16 %v150
    %v183 = vunpack.c.l.b16 %v151
    %v184 = vunpack.c.l.b16 %v152
    %v185 = vunpack.c.l.b16 %v153
    %v186 = vunpack.c.l.b16 %v154
    %v187 = vunpack.c.l.b16 %v155
    %v188 = vunpack.c.l.b16 %v156
    %v189 = vunpack.c.l.b16 %v157
    %v190 = vunpack.c.l.b16 %v158
    %v191 = vunpack.c.l.b16 %v159
    %v192 = vunpack.c.l.b16 %v160
    %v193 = vpack.c.b16 %v178, %v177
    %v194 = vpack.c.b16 %v180, %v179
    %v195 = vpack.c.b16 %v182, %v181
    %v196 = vpack.c.b16 %v184, %v183
    %v197 = vpack.c.b16 %v186, %v185
    %v198 = vpack.c.b16 %v188, %v187
    %v199 = vpack.c.b16 %v190, %v189
    %v200 = vpack.c.b16 %v192, %v191
    %209 = vmatprep.subr.bf16.mxu0 0
    %210 = vmatpush1.bf16.msra.mxu0 %v193
    %211 = vmatprep.subr.bf16.mxu0 0
    %212 = vmatpush1.bf16.msra.mxu0 %v194
    %213 = vmatprep.subr.bf16.mxu0 0
    %214 = vmatpush1.bf16.msra.mxu0 %v195
    %215 = vmatprep.subr.bf16.mxu0 0
    %216 = vmatpush1.bf16.msra.mxu0 %v196
    %217 = vmatprep.subr.bf16.mxu0 0
    %218 = vmatpush1.bf16.msra.mxu0 %v197
    %219 = vmatprep.subr.bf16.mxu0 0
    %220 = vmatpush1.bf16.msra.mxu0 %v198
    %221 = vmatprep.subr.bf16.mxu0 0
    %222 = vmatpush1.bf16.msra.mxu0 %v199
    %223 = vmatprep.subr.bf16.mxu0 0
    %224 = vmatpush1.bf16.msra.mxu0 %v200
    %225 = vmatprep.subr.bf16.mxu0 0
    %226 = vmatpush1.bf16.msra.mxu0 0
    %227 = vmatprep.subr.bf16.mxu0 0
    %228 = vmatpush1.bf16.msra.mxu0 0
    %229 = vmatprep.subr.bf16.mxu0 0
    %230 = vmatpush1.bf16.msra.mxu0 0
    %231 = vmatprep.subr.bf16.mxu0 0
    %232 = vmatpush1.bf16.msra.mxu0 0
    %233 = vmatprep.subr.bf16.mxu0 0
    %234 = vmatpush1.bf16.msra.mxu0 0
    %235 = vmatprep.subr.bf16.mxu0 0
    %236 = vmatpush1.bf16.msra.mxu0 0
    %237 = vmatprep.subr.bf16.mxu0 0
    %238 = vmatpush1.bf16.msra.mxu0 0
    %239 = vmatprep.subr.bf16.mxu0 0
    %240 = vmatpush1.bf16.msra.mxu0 0
    %241 = vmatprep.mubr.bf16.mxu0 0
    %242 = vmatmul.mubr.bf16.gmra.mrb[0].mxu0 %v39
    %v243 = vpop.f32.mrb[0].mxu0
    %v244 = vadd.f32 0.0, %v243
    %v245 = vpop.f32.mrb[0].mxu0
    %v246 = vpop.f32.mrb[0].mxu0
    %v247 = vpop.f32.mrb[0].mxu0
    %248 = vdwg.mxu0
    %249 = vst [vmem:[#allocation2 + $0x2] sm:$0x3] %v244
    %v250 = vld [vmem:[#allocation3 + $0x80] sm:$0xf]
    %v251 = vld [vmem:[#allocation3 + $0x84] sm:$0xf]
    %v252 = vld [vmem:[#allocation3 + $0x88] sm:$0xf]
    %v253 = vld [vmem:[#allocation3 + $0x8c] sm:$0xf]
    %v254 = vld [vmem:[#allocation3 + $0x90] sm:$0xf]
    %v255 = vld [vmem:[#allocation3 + $0x94] sm:$0xf]
    %v256 = vld [vmem:[#allocation3 + $0x98] sm:$0xf]
    %v257 = vld [vmem:[#allocation3 + $0x9c] sm:$0xf]
    %v258 = vld [vmem:[#allocation3 + $0xa0] sm:$0xf]
    %v259 = vld [vmem:[#allocation3 + $0xa4] sm:$0xf]
    %v260 = vld [vmem:[#allocation3 + $0xa8] sm:$0xf]
    %v261 = vld [vmem:[#allocation3 + $0xac] sm:$0xf]
    %v262 = vld [vmem:[#allocation3 + $0xb0] sm:$0xf]
    %v263 = vld [vmem:[#allocation3 + $0xb4] sm:$0xf]
    %v264 = vld [vmem:[#allocation3 + $0xb8] sm:$0xf]
    %v265 = vld [vmem:[#allocation3 + $0xbc] sm:$0xf]
    %v282 = vunpack.c.l.b16 %v250
    %v283 = vunpack.c.l.b16 %v251
    %v284 = vunpack.c.l.b16 %v252
    %v285 = vunpack.c.l.b16 %v253
    %v286 = vunpack.c.l.b16 %v254
    %v287 = vunpack.c.l.b16 %v255
    %v288 = vunpack.c.l.b16 %v256
    %v289 = vunpack.c.l.b16 %v257
    %v290 = vunpack.c.l.b16 %v258
    %v291 = vunpack.c.l.b16 %v259
    %v292 = vunpack.c.l.b16 %v260
    %v293 = vunpack.c.l.b16 %v261
    %v294 = vunpack.c.l.b16 %v262
    %v295 = vunpack.c.l.b16 %v263
    %v296 = vunpack.c.l.b16 %v264
    %v297 = vunpack.c.l.b16 %v265
    %v298 = vpack.c.b16 %v283, %v282
    %v299 = vpack.c.b16 %v285, %v284
    %v300 = vpack.c.b16 %v287, %v286
    %v301 = vpack.c.b16 %v289, %v288
    %v302 = vpack.c.b16 %v291, %v290
    %v303 = vpack.c.b16 %v293, %v292
    %v304 = vpack.c.b16 %v295, %v294
    %v305 = vpack.c.b16 %v297, %v296
    %314 = vmatprep.subr.bf16.mxu0 0
    %315 = vmatpush1.bf16.msra.mxu0 %v298
    %316 = vmatprep.subr.bf16.mxu0 0
    %317 = vmatpush1.bf16.msra.mxu0 %v299
    %318 = vmatprep.subr.bf16.mxu0 0
    %319 = vmatpush1.bf16.msra.mxu0 %v300
    %320 = vmatprep.subr.bf16.mxu0 0
    %321 = vmatpush1.bf16.msra.mxu0 %v301
    %322 = vmatprep.subr.bf16.mxu0 0
    %323 = vmatpush1.bf16.msra.mxu0 %v302
    %324 = vmatprep.subr.bf16.mxu0 0
    %325 = vmatpush1.bf16.msra.mxu0 %v303
    %326 = vmatprep.subr.bf16.mxu0 0
    %327 = vmatpush1.bf16.msra.mxu0 %v304
    %328 = vmatprep.subr.bf16.mxu0 0
    %329 = vmatpush1.bf16.msra.mxu0 %v305
    %330 = vmatprep.subr.bf16.mxu0 0
    %331 = vmatpush1.bf16.msra.mxu0 0
    %332 = vmatprep.subr.bf16.mxu0 0
    %333 = vmatpush1.bf16.msra.mxu0 0
    %334 = vmatprep.subr.bf16.mxu0 0
    %335 = vmatpush1.bf16.msra.mxu0 0
    %336 = vmatprep.subr.bf16.mxu0 0
    %337 = vmatpush1.bf16.msra.mxu0 0
    %338 = vmatprep.subr.bf16.mxu0 0
    %339 = vmatpush1.bf16.msra.mxu0 0
    %340 = vmatprep.subr.bf16.mxu0 0
    %341 = vmatpush1.bf16.msra.mxu0 0
    %342 = vmatprep.subr.bf16.mxu0 0
    %343 = vmatpush1.bf16.msra.mxu0 0
    %344 = vmatprep.subr.bf16.mxu0 0
    %345 = vmatpush1.bf16.msra.mxu0 0
    %346 = vmatprep.mubr.bf16.mxu0 0
    %347 = vmatmul.mubr.bf16.gmra.mrb[0].mxu0 %v39
    %v348 = vpop.f32.mrb[0].mxu0
    %v349 = vadd.f32 0.0, %v348
    %v350 = vpop.f32.mrb[0].mxu0
    %v351 = vpop.f32.mrb[0].mxu0
    %v352 = vpop.f32.mrb[0].mxu0
    %353 = vdwg.mxu0
    %354 = vst [vmem:[#allocation2 + $0x4] sm:$0x3] %v349
    %v355 = vld [vmem:[#allocation3 + $0xc0] sm:$0xf]
    %v356 = vld [vmem:[#allocation3 + $0xc4] sm:$0xf]
    %v357 = vld [vmem:[#allocation3 + $0xc8] sm:$0xf]
    %v358 = vld [vmem:[#allocation3 + $0xcc] sm:$0xf]
    %v359 = vld [vmem:[#allocation3 + $0xd0] sm:$0xf]
    %v360 = vld [vmem:[#allocation3 + $0xd4] sm:$0xf]
    %v361 = vld [vmem:[#allocation3 + $0xd8] sm:$0xf]
    %v362 = vld [vmem:[#allocation3 + $0xdc] sm:$0xf]
    %v363 = vld [vmem:[#allocation3 + $0xe0] sm:$0xf]
    %v364 = vld [vmem:[#allocation3 + $0xe4] sm:$0xf]
    %v365 = vld [vmem:[#allocation3 + $0xe8] sm:$0xf]
    %v366 = vld [vmem:[#allocation3 + $0xec] sm:$0xf]
    %v367 = vld [vmem:[#allocation3 + $0xf0] sm:$0xf]
    %v368 = vld [vmem:[#allocation3 + $0xf4] sm:$0xf]
    %v369 = vld [vmem:[#allocation3 + $0xf8] sm:$0xf]
    %v370 = vld [vmem:[#allocation3 + $0xfc] sm:$0xf]
    %v387 = vunpack.c.l.b16 %v355
    %v388 = vunpack.c.l.b16 %v356
    %v389 = vunpack.c.l.b16 %v357
    %v390 = vunpack.c.l.b16 %v358
    %v391 = vunpack.c.l.b16 %v359
    %v392 = vunpack.c.l.b16 %v360
    %v393 = vunpack.c.l.b16 %v361
    %v394 = vunpack.c.l.b16 %v362
    %v395 = vunpack.c.l.b16 %v363
    %v396 = vunpack.c.l.b16 %v364
    %v397 = vunpack.c.l.b16 %v365
    %v398 = vunpack.c.l.b16 %v366
    %v399 = vunpack.c.l.b16 %v367
    %v400 = vunpack.c.l.b16 %v368
    %v401 = vunpack.c.l.b16 %v369
    %v402 = vunpack.c.l.b16 %v370
    %v403 = vpack.c.b16 %v388, %v387
    %v404 = vpack.c.b16 %v390, %v389
    %v405 = vpack.c.b16 %v392, %v391
    %v406 = vpack.c.b16 %v394, %v393
    %v407 = vpack.c.b16 %v396, %v395
    %v408 = vpack.c.b16 %v398, %v397
    %v409 = vpack.c.b16 %v400, %v399
    %v410 = vpack.c.b16 %v402, %v401
    %419 = vmatprep.subr.bf16.mxu0 0
    %420 = vmatpush1.bf16.msra.mxu0 %v403
    %421 = vmatprep.subr.bf16.mxu0 0
    %422 = vmatpush1.bf16.msra.mxu0 %v404
    %423 = vmatprep.subr.bf16.mxu0 0
    %424 = vmatpush1.bf16.msra.mxu0 %v405
    %425 = vmatprep.subr.bf16.mxu0 0
    %426 = vmatpush1.bf16.msra.mxu0 %v406
    %427 = vmatprep.subr.bf16.mxu0 0
    %428 = vmatpush1.bf16.msra.mxu0 %v407
    %429 = vmatprep.subr.bf16.mxu0 0
    %430 = vmatpush1.bf16.msra.mxu0 %v408
    %431 = vmatprep.subr.bf16.mxu0 0
    %432 = vmatpush1.bf16.msra.mxu0 %v409
    %433 = vmatprep.subr.bf16.mxu0 0
    %434 = vmatpush1.bf16.msra.mxu0 %v410
    %435 = vmatprep.subr.bf16.mxu0 0
    %436 = vmatpush1.bf16.msra.mxu0 0
    %437 = vmatprep.subr.bf16.mxu0 0
    %438 = vmatpush1.bf16.msra.mxu0 0
    %439 = vmatprep.subr.bf16.mxu0 0
    %440 = vmatpush1.bf16.msra.mxu0 0
    %441 = vmatprep.subr.bf16.mxu0 0
    %442 = vmatpush1.bf16.msra.mxu0 0
    %443 = vmatprep.subr.bf16.mxu0 0
    %444 = vmatpush1.bf16.msra.mxu0 0
    %445 = vmatprep.subr.bf16.mxu0 0
    %446 = vmatpush1.bf16.msra.mxu0 0
    %447 = vmatprep.subr.bf16.mxu0 0
    %448 = vmatpush1.bf16.msra.mxu0 0
    %449 = vmatprep.subr.bf16.mxu0 0
    %450 = vmatpush1.bf16.msra.mxu0 0
    %451 = vmatprep.mubr.bf16.mxu0 0
    %452 = vmatmul.mubr.bf16.gmra.mrb[0].mxu0 %v39
    %v453 = vpop.f32.mrb[0].mxu0
    %v454 = vadd.f32 0.0, %v453
    %v455 = vpop.f32.mrb[0].mxu0
    %v456 = vpop.f32.mrb[0].mxu0
    %v457 = vpop.f32.mrb[0].mxu0
    %458 = vdwg.mxu0
    %459 = vst [vmem:[#allocation2 + $0x6] sm:$0x3] %v454
    %v460 = vld [vmem:[#allocation2] sm:$0xff]
    %462 = vrot.lane.b32.xlu0 %v460, 64
    %v463 = vpop.permute.xlu0 %462
    %v465 = vmax.f32 %v460, %v463
    %v466 = vlaneseq
    %v467 = vshrl.u32 %v466, 7
    %v468 = vsub.s32 0, %v467
    %v469 = vrot.slane %v37, %v468
    %v470 = vadd.f32 %v465, %v469
    %v471 = vtanh.pop %v470
    %v472 = vlaneseq
    %v473 = vshrl.u32 %v472, 7
    %v474 = vsub.s32 1, %v473
    %v475 = vrot.slane %v37, %v474
    %vm476 = vcmask 523264
    %v478 = vsel %vm476, %v471, 0
    %480 = vmatprep.subr.mxu0 0.0
    %481 = vmatpush1.msra.mxu0 %v29
    %482 = vmatprep.subr.mxu0 0.0
    %483 = vmatpush1.msra.mxu0 %v30
    %484 = vmatprep.subr.mxu0 0.0
    %485 = vmatpush1.msra.mxu0 %v31
    %486 = vmatprep.subr.mxu0 0.0
    %487 = vmatpush1.msra.mxu0 %v32
    %488 = vmatprep.subr.mxu0 0.0
    %489 = vmatpush1.msra.mxu0 %v33
    %490 = vmatprep.subr.mxu0 0.0
    %491 = vmatpush1.msra.mxu0 %v34
    %492 = vmatprep.subr.mxu0 0.0
    %493 = vmatpush1.msra.mxu0 %v35
    %494 = vmatprep.subr.mxu0 0.0
    %495 = vmatpush1.msra.mxu0 %v36
    %496 = vmatprep.subr.mxu0 0.0
    %497 = vmatpush1.msra.mxu0 0.0
    %498 = vmatprep.subr.mxu0 0.0
    %499 = vmatpush1.msra.mxu0 0.0
    %500 = vmatprep.subr.mxu0 0.0
    %501 = vmatpush1.msra.mxu0 0.0
    %502 = vmatprep.subr.mxu0 0.0
    %503 = vmatpush1.msra.mxu0 0.0
    %504 = vmatprep.subr.mxu0 0.0
    %505 = vmatpush1.msra.mxu0 0.0
    %506 = vmatprep.subr.mxu0 0.0
    %507 = vmatpush1.msra.mxu0 0.0
    %508 = vmatprep.subr.mxu0 0.0
    %509 = vmatpush1.msra.mxu0 0.0
    %510 = vmatprep.subr.mxu0 0.0
    %511 = vmatpush1.msra.mxu0 0.0
    %512 = vmatprep.subr.mxu0 0.0
    %513 = vmatpush1.msra.mxu0 0.0
    %514 = vmatprep.subr.mxu0 0.0
    %515 = vmatpush1.msra.mxu0 0.0
    %516 = vmatprep.subr.mxu0 0.0
    %517 = vmatpush1.msra.mxu0 0.0
    %518 = vmatprep.subr.mxu0 0.0
    %519 = vmatpush1.msra.mxu0 0.0
    %520 = vmatprep.subr.mxu0 0.0
    %521 = vmatpush1.msra.mxu0 0.0
    %522 = vmatprep.subr.mxu0 0.0
    %523 = vmatpush1.msra.mxu0 0.0
    %524 = vmatprep.subr.mxu0 0.0
    %525 = vmatpush1.msra.mxu0 0.0
    %526 = vmatprep.subr.mxu0 0.0
    %527 = vmatpush1.msra.mxu0 0.0
    %528 = vmatprep.subr.mxu0 0.0
    %529 = vmatpush1.msra.mxu0 0.0
    %530 = vmatprep.subr.mxu0 0.0
    %531 = vmatpush1.msra.mxu0 0.0
    %532 = vmatprep.subr.mxu0 0.0
    %533 = vmatpush1.msra.mxu0 0.0
    %534 = vmatprep.subr.mxu0 0.0
    %535 = vmatpush1.msra.mxu0 0.0
    %536 = vmatprep.subr.mxu0 0.0
    %537 = vmatpush1.msra.mxu0 0.0
    %538 = vmatprep.subr.mxu0 0.0
    %539 = vmatpush1.msra.mxu0 0.0
    %540 = vmatprep.subr.mxu0 0.0
    %541 = vmatpush1.msra.mxu0 0.0
    %542 = vmatprep.subr.mxu0 0.0
    %543 = vmatpush1.msra.mxu0 0.0
    %544 = vmatprep.mubr.f32.mxu0 0.0
    %545 = vmatmul.mubr.f32.gmra.mrb[0].mxu0 %v478
    %v546 = vpop.f32.mrb[0].mxu0
    %v547 = vadd.f32 %v475, %v546
    %v548 = vpop.f32.mrb[0].mxu0
    %549 = vdwg.mxu0
    %v550 = vtanh.pop %v547
    %v551 = vmul.f32 %v550, -2.0
    %v552 = vmul.f32 %v550, %v550
    %554 = vrot.lane.b32.xlu0 %v552, 96
    %v555 = vpop.permute.xlu0 %554
    %v557 = vadd.f32 %v552, %v555
    %v558 = vmul.f32 %v551, %v551
    %v559 = vsub.f32 %v558, %v557
    %vm560 = vcmask 261120
    %v561 = vsel %vm560, %v559, -inf
    %562 = vmax.xlane.f32.xlu0 %v561
    %v563 = vpop.xlane.xlu0 %562
    %v564 = vsub.f32 %v559, %v563
    %v565 = vmul.f32 %v564, 1.442695
    %v566 = vpow.pop %v565
    %v567 = vsel %vm560, %v566, 0.0
    %568 = vadd.xlane.f32.xlu0 %v567
    %v569 = vpop.xlane.xlu0 %568
    %v570 = vrcp.pop %v569
    %v571 = vmul.f32 %v566, %v570
    %v572 = vmul.f32 %v551, %v571
    %v573 = vmul.f32 %v557, %v571
    %v574 = vmul.f32 %v572, %v573
    %v575 = vmul.f32 %v572, %v572
    %v576 = vsub.f32 %v575, %v573
    %v577 = vmul.f32 %v576, %v550
    %v578 = vadd.f32 %v574, %v577
    %580 = vrot.lane.b32.xlu0 %v550, 96
    %v581 = vpop.permute.xlu0 %580
    %v583 = vmul.f32 %v576, %v581
    %v584 = vsel %vm560, %v578, 0.0
    %585 = vadd.xlane.f32.xlu0 %v584
    %v586 = vpop.xlane.xlu0 %585
    %v587 = vrcp.pop 32.0
    %v588 = vmul.f32 %v586, %v587
    %v589 = vsub.f32 %v578, %v588
    %v590 = vmul.f32 %v589, %v589
    %v591 = vsel %vm560, %v590, 0.0
    %592 = vadd.xlane.f32.xlu0 %v591
    %v593 = vpop.xlane.xlu0 %592
    %v594 = vmul.f32 %v593, %v587
    %v595 = vadd.f32 %v594, 1e-05
    %v596 = vrsqrt.pop %v595
    %v597 = vmul.f32 %v589, %v596
    %599 = vrot.lane.b32.xlu0 %v469, 64
    %v600 = vpop.permute.xlu0 %599
    %v602 = vmul.f32 %v597, %v600
    %603 = vrot.lane.b32.xlu0 %v469, 32
    %v604 = vpop.permute.xlu0 %603
    %v606 = vadd.f32 %v602, %v604
    %v607 = vsel %vm560, %v583, 0.0
    %608 = vadd.xlane.f32.xlu0 %v607
    %v609 = vpop.xlane.xlu0 %608
    %v610 = vmul.f32 %v609, %v587
    %v611 = vsub.f32 %v583, %v610
    %v612 = vmul.f32 %v611, %v611
    %v613 = vsel %vm560, %v612, 0.0
    %614 = vadd.xlane.f32.xlu0 %v613
    %v615 = vpop.xlane.xlu0 %614
    %v616 = vmul.f32 %v615, %v587
    %v617 = vadd.f32 %v616, 1e-05
    %v618 = vrsqrt.pop %v617
    %v619 = vmul.f32 %v611, %v618
    %v620 = vmul.f32 %v619, %v600
    %v621 = vadd.f32 %v620, %v604
    %630 = vrot.lane.b32.xlu0 %v29, 56
    %v631 = vpop.permute.xlu0 %630
    %632 = vrot.lane.b32.xlu0 %v30, 56
    %v633 = vpop.permute.xlu0 %632
    %634 = vrot.lane.b32.xlu0 %v31, 56
    %v635 = vpop.permute.xlu0 %634
    %636 = vrot.lane.b32.xlu0 %v32, 56
    %v637 = vpop.permute.xlu0 %636
    %638 = vrot.lane.b32.xlu0 %v33, 56
    %v639 = vpop.permute.xlu0 %638
    %640 = vrot.lane.b32.xlu0 %v34, 56
    %v641 = vpop.permute.xlu0 %640
    %642 = vrot.lane.b32.xlu0 %v35, 56
    %v643 = vpop.permute.xlu0 %642
    %644 = vrot.lane.b32.xlu0 %v36, 56
    %v645 = vpop.permute.xlu0 %644
    %vm646 = vcmask 64512
    %v647 = vsel %vm646, %v631, 0
    %v649 = vsel %vm646, %v633, 0
    %v651 = vsel %vm646, %v635, 0
    %v653 = vsel %vm646, %v637, 0
    %v655 = vsel %vm646, %v639, 0
    %v657 = vsel %vm646, %v641, 0
    %v659 = vsel %vm646, %v643, 0
    %v661 = vsel %vm646, %v645, 0
    %663 = vmatprep.subr.mxu0 0.0
    %664 = vmatpush1.msra.mxu0 %v621
    %665 = vmatprep.subr.mxu0 0.0
    %666 = vmatpush1.msra.mxu0 0.0
    %667 = vmatprep.subr.mxu0 0.0
    %668 = vmatpush1.msra.mxu0 0.0
    %669 = vmatprep.subr.mxu0 0.0
    %670 = vmatpush1.msra.mxu0 0.0
    %671 = vmatprep.subr.mxu0 0.0
    %672 = vmatpush1.msra.mxu0 0.0
    %673 = vmatprep.subr.mxu0 0.0
    %674 = vmatpush1.msra.mxu0 0.0
    %675 = vmatprep.subr.mxu0 0.0
    %676 = vmatpush1.msra.mxu0 0.0
    %677 = vmatprep.subr.mxu0 0.0
    %678 = vmatpush1.msra.mxu0 0.0
    %679 = vmatprep.subr.mxu0 0.0
    %680 = vmatpush1.msra.mxu0 0.0
    %681 = vmatprep.subr.mxu0 0.0
    %682 = vmatpush1.msra.mxu0 0.0
    %683 = vmatprep.subr.mxu0 0.0
    %684 = vmatpush1.msra.mxu0 0.0
    %685 = vmatprep.subr.mxu0 0.0
    %686 = vmatpush1.msra.mxu0 0.0
    %687 = vmatprep.subr.mxu0 0.0
    %688 = vmatpush1.msra.mxu0 0.0
    %689 = vmatprep.subr.mxu0 0.0
    %690 = vmatpush1.msra.mxu0 0.0
    %691 = vmatprep.subr.mxu0 0.0
    %692 = vmatpush1.msra.mxu0 0.0
    %693 = vmatprep.subr.mxu0 0.0
    %694 = vmatpush1.msra.mxu0 0.0
    %695 = vmatprep.subr.mxu0 0.0
    %696 = vmatpush1.msra.mxu0 0.0
    %697 = vmatprep.subr.mxu0 0.0
    %698 = vmatpush1.msra.mxu0 0.0
    %699 = vmatprep.subr.mxu0 0.0
    %700 = vmatpush1.msra.mxu0 0.0
    %701 = vmatprep.subr.mxu0 0.0
    %702 = vmatpush1.msra.mxu0 0.0
    %703 = vmatprep.subr.mxu0 0.0
    %704 = vmatpush1.msra.mxu0 0.0
    %705 = vmatprep.subr.mxu0 0.0
    %706 = vmatpush1.msra.mxu0 0.0
    %707 = vmatprep.subr.mxu0 0.0
    %708 = vmatpush1.msra.mxu0 0.0
    %709 = vmatprep.subr.mxu0 0.0
    %710 = vmatpush1.msra.mxu0 0.0
    %711 = vmatprep.subr.mxu0 0.0
    %712 = vmatpush1.msra.mxu0 0.0
    %713 = vmatprep.subr.mxu0 0.0
    %714 = vmatpush1.msra.mxu0 0.0
    %715 = vmatprep.subr.mxu0 0.0
    %716 = vmatpush1.msra.mxu0 0.0
    %717 = vmatprep.subr.mxu0 0.0
    %718 = vmatpush1.msra.mxu0 0.0
    %719 = vmatprep.subr.mxu0 0.0
    %720 = vmatpush1.msra.mxu0 0.0
    %721 = vmatprep.subr.mxu0 0.0
    %722 = vmatpush1.msra.mxu0 0.0
    %723 = vmatprep.subr.mxu0 0.0
    %724 = vmatpush1.msra.mxu0 0.0
    %725 = vmatprep.subr.mxu0 0.0
    %726 = vmatpush1.msra.mxu0 0.0
    %727 = vmatprep.mubr.f32.mxu0 0.0
    %728 = vmatmul.mubr.f32.gmra.mrb[0].mxu0 %v647
    %v729 = vpop.f32.mrb[0].mxu0
    %v730 = vadd.f32 0.0, %v729
    %v731 = vpop.f32.mrb[0].mxu0
    %732 = vmatprep.mubr.f32.mxu0 0.0
    %733 = vmatmul.mubr.f32.gmra.mrb[0].mxu0 %v649
    %v734 = vpop.f32.mrb[0].mxu0
    %v735 = vadd.f32 0.0, %v734
    %v736 = vpop.f32.mrb[0].mxu0
    %737 = vmatprep.mubr.f32.mxu0 0.0
    %738 = vmatmul.mubr.f32.gmra.mrb[0].mxu0 %v651
    %v739 = vpop.f32.mrb[0].mxu0
    %v740 = vadd.f32 0.0, %v739
    %v741 = vpop.f32.mrb[0].mxu0
    %742 = vmatprep.mubr.f32.mxu0 0.0
    %743 = vmatmul.mubr.f32.gmra.mrb[0].mxu0 %v653
    %v744 = vpop.f32.mrb[0].mxu0
    %v745 = vadd.f32 0.0, %v744
    %v746 = vpop.f32.mrb[0].mxu0
    %747 = vmatprep.mubr.f32.mxu0 0.0
    %748 = vmatmul.mubr.f32.gmra.mrb[0].mxu0 %v655
    %v749 = vpop.f32.mrb[0].mxu0
    %v750 = vadd.f32 0.0, %v749
    %v751 = vpop.f32.mrb[0].mxu0
    %752 = vmatprep.mubr.f32.mxu0 0.0
    %753 = vmatmul.mubr.f32.gmra.mrb[0].mxu0 %v657
    %v754 = vpop.f32.mrb[0].mxu0
    %v755 = vadd.f32 0.0, %v754
    %v756 = vpop.f32.mrb[0].mxu0
    %757 = vmatprep.mubr.f32.mxu0 0.0
    %758 = vmatmul.mubr.f32.gmra.mrb[0].mxu0 %v659
    %v759 = vpop.f32.mrb[0].mxu0
    %v760 = vadd.f32 0.0, %v759
    %v761 = vpop.f32.mrb[0].mxu0
    %762 = vmatprep.mubr.f32.mxu0 0.0
    %763 = vmatmul.mubr.f32.gmra.mrb[0].mxu0 %v661
    %v764 = vpop.f32.mrb[0].mxu0
    %v765 = vadd.f32 0.0, %v764
    %v766 = vpop.f32.mrb[0].mxu0
    %767 = vdwg.mxu0
    %768 = vrot.lane.b32.xlu0 %v29, 64
    %v769 = vpop.permute.xlu0 %768
    %770 = vrot.lane.b32.xlu0 %v30, 64
    %v771 = vpop.permute.xlu0 %770
    %772 = vrot.lane.b32.xlu0 %v31, 64
    %v773 = vpop.permute.xlu0 %772
    %774 = vrot.lane.b32.xlu0 %v32, 64
    %v775 = vpop.permute.xlu0 %774
    %776 = vrot.lane.b32.xlu0 %v33, 64
    %v777 = vpop.permute.xlu0 %776
    %778 = vrot.lane.b32.xlu0 %v34, 64
    %v779 = vpop.permute.xlu0 %778
    %780 = vrot.lane.b32.xlu0 %v35, 64
    %v781 = vpop.permute.xlu0 %780
    %782 = vrot.lane.b32.xlu0 %v36, 64
    %v783 = vpop.permute.xlu0 %782
    %v784 = vsel %vm646, %v769, 0
    %v786 = vsel %vm646, %v771, 0
    %v788 = vsel %vm646, %v773, 0
    %v790 = vsel %vm646, %v775, 0
    %v792 = vsel %vm646, %v777, 0
    %v794 = vsel %vm646, %v779, 0
    %v796 = vsel %vm646, %v781, 0
    %v798 = vsel %vm646, %v783, 0
    %800 = vmatprep.subr.mxu0 0.0
    %801 = vmatpush1.msra.mxu0 %v606
    %802 = vmatprep.subr.mxu0 0.0
    %803 = vmatpush1.msra.mxu0 0.0
    %804 = vmatprep.subr.mxu0 0.0
    %805 = vmatpush1.msra.mxu0 0.0
    %806 = vmatprep.subr.mxu0 0.0
    %807 = vmatpush1.msra.mxu0 0.0
    %808 = vmatprep.subr.mxu0 0.0
    %809 = vmatpush1.msra.mxu0 0.0
    %810 = vmatprep.subr.mxu0 0.0
    %811 = vmatpush1.msra.mxu0 0.0
    %812 = vmatprep.subr.mxu0 0.0
    %813 = vmatpush1.msra.mxu0 0.0
    %814 = vmatprep.subr.mxu0 0.0
    %815 = vmatpush1.msra.mxu0 0.0
    %816 = vmatprep.subr.mxu0 0.0
    %817 = vmatpush1.msra.mxu0 0.0
    %818 = vmatprep.subr.mxu0 0.0
    %819 = vmatpush1.msra.mxu0 0.0
    %820 = vmatprep.subr.mxu0 0.0
    %821 = vmatpush1.msra.mxu0 0.0
    %822 = vmatprep.subr.mxu0 0.0
    %823 = vmatpush1.msra.mxu0 0.0
    %824 = vmatprep.subr.mxu0 0.0
    %825 = vmatpush1.msra.mxu0 0.0
    %826 = vmatprep.subr.mxu0 0.0
    %827 = vmatpush1.msra.mxu0 0.0
    %828 = vmatprep.subr.mxu0 0.0
    %829 = vmatpush1.msra.mxu0 0.0
    %830 = vmatprep.subr.mxu0 0.0
    %831 = vmatpush1.msra.mxu0 0.0
    %832 = vmatprep.subr.mxu0 0.0
    %833 = vmatpush1.msra.mxu0 0.0
    %834 = vmatprep.subr.mxu0 0.0
    %835 = vmatpush1.msra.mxu0 0.0
    %836 = vmatprep.subr.mxu0 0.0
    %837 = vmatpush1.msra.mxu0 0.0
    %838 = vmatprep.subr.mxu0 0.0
    %839 = vmatpush1.msra.mxu0 0.0
    %840 = vmatprep.subr.mxu0 0.0
    %841 = vmatpush1.msra.mxu0 0.0
    %842 = vmatprep.subr.mxu0 0.0
    %843 = vmatpush1.msra.mxu0 0.0
    %844 = vmatprep.subr.mxu0 0.0
    %845 = vmatpush1.msra.mxu0 0.0
    %846 = vmatprep.subr.mxu0 0.0
    %847 = vmatpush1.msra.mxu0 0.0
    %848 = vmatprep.subr.mxu0 0.0
    %849 = vmatpush1.msra.mxu0 0.0
    %850 = vmatprep.subr.mxu0 0.0
    %851 = vmatpush1.msra.mxu0 0.0
    %852 = vmatprep.subr.mxu0 0.0
    %853 = vmatpush1.msra.mxu0 0.0
    %854 = vmatprep.subr.mxu0 0.0
    %855 = vmatpush1.msra.mxu0 0.0
    %856 = vmatprep.subr.mxu0 0.0
    %857 = vmatpush1.msra.mxu0 0.0
    %858 = vmatprep.subr.mxu0 0.0
    %859 = vmatpush1.msra.mxu0 0.0
    %860 = vmatprep.subr.mxu0 0.0
    %861 = vmatpush1.msra.mxu0 0.0
    %862 = vmatprep.subr.mxu0 0.0
    %863 = vmatpush1.msra.mxu0 0.0
    %864 = vmatprep.mubr.f32.mxu0 0.0
    %865 = vmatmul.mubr.f32.gmra.mrb[0].mxu0 %v784
    %v866 = vpop.f32.mrb[0].mxu0
    %v867 = vadd.f32 %v730, %v866
    %v868 = vpop.f32.mrb[0].mxu0
    %869 = vmatprep.mubr.f32.mxu0 0.0
    %870 = vmatmul.mubr.f32.gmra.mrb[0].mxu0 %v786
    %v871 = vpop.f32.mrb[0].mxu0
    %v872 = vadd.f32 %v735, %v871
    %v873 = vpop.f32.mrb[0].mxu0
    %874 = vmatprep.mubr.f32.mxu0 0.0
    %875 = vmatmul.mubr.f32.gmra.mrb[0].mxu0 %v788
    %v876 = vpop.f32.mrb[0].mxu0
    %v877 = vadd.f32 %v740, %v876
    %v878 = vpop.f32.mrb[0].mxu0
    %879 = vmatprep.mubr.f32.mxu0 0.0
    %880 = vmatmul.mubr.f32.gmra.mrb[0].mxu0 %v790
    %v881 = vpop.f32.mrb[0].mxu0
    %v882 = vadd.f32 %v745, %v881
    %v883 = vpop.f32.mrb[0].mxu0
    %884 = vmatprep.mubr.f32.mxu0 0.0
    %885 = vmatmul.mubr.f32.gmra.mrb[0].mxu0 %v792
    %v886 = vpop.f32.mrb[0].mxu0
    %v887 = vadd.f32 %v750, %v886
    %v888 = vpop.f32.mrb[0].mxu0
    %889 = vmatprep.mubr.f32.mxu0 0.0
    %890 = vmatmul.mubr.f32.gmra.mrb[0].mxu0 %v794
    %v891 = vpop.f32.mrb[0].mxu0
    %v892 = vadd.f32 %v755, %v891
    %v893 = vpop.f32.mrb[0].mxu0
    %894 = vmatprep.mubr.f32.mxu0 0.0
    %895 = vmatmul.mubr.f32.gmra.mrb[0].mxu0 %v796
    %v896 = vpop.f32.mrb[0].mxu0
    %v897 = vadd.f32 %v760, %v896
    %v898 = vpop.f32.mrb[0].mxu0
    %899 = vmatprep.mubr.f32.mxu0 0.0
    %900 = vmatmul.mubr.f32.gmra.mrb[0].mxu0 %v798
    %v901 = vpop.f32.mrb[0].mxu0
    %v902 = vadd.f32 %v765, %v901
    %v903 = vpop.f32.mrb[0].mxu0
    %904 = vdwg.mxu0
    %905 = vset.pattern.permute.xlu0 84
    %906 = vperm.xlu0 %905, %v29
    %v907 = vpop.permute.xlu0 %906
    %909 = vset.pattern.permute.xlu0 84
    %910 = vperm.xlu0 %909, %v30
    %v911 = vpop.permute.xlu0 %910
    %913 = vset.pattern.permute.xlu0 84
    %914 = vperm.xlu0 %913, %v31
    %v915 = vpop.permute.xlu0 %914
    %917 = vset.pattern.permute.xlu0 84
    %918 = vperm.xlu0 %917, %v32
    %v919 = vpop.permute.xlu0 %918
    %921 = vset.pattern.permute.xlu0 84
    %922 = vperm.xlu0 %921, %v33
    %v923 = vpop.permute.xlu0 %922
    %925 = vset.pattern.permute.xlu0 84
    %926 = vperm.xlu0 %925, %v34
    %v927 = vpop.permute.xlu0 %926
    %929 = vset.pattern.permute.xlu0 84
    %930 = vperm.xlu0 %929, %v35
    %v931 = vpop.permute.xlu0 %930
    %933 = vset.pattern.permute.xlu0 84
    %934 = vperm.xlu0 %933, %v36
    %v935 = vpop.permute.xlu0 %934
    %v937 = vadd.f32 %v867, %v907
    %v938 = vadd.f32 %v872, %v911
    %v939 = vadd.f32 %v877, %v915
    %v940 = vadd.f32 %v882, %v919
    %v941 = vadd.f32 %v887, %v923
    %v942 = vadd.f32 %v892, %v927
    %v943 = vadd.f32 %v897, %v931
    %v944 = vadd.f32 %v902, %v935
    %v945 = vmax.f32 %v937, 0.0
    %v946 = vmax.f32 %v938, 0.0
    %v947 = vmax.f32 %v939, 0.0
    %v948 = vmax.f32 %v940, 0.0
    %v949 = vmax.f32 %v941, 0.0
    %v950 = vmax.f32 %v942, 0.0
    %v951 = vmax.f32 %v943, 0.0
    %v952 = vmax.f32 %v944, 0.0
    %953 = vrot.lane.b32.xlu0 %v29, 48
    %v954 = vpop.permute.xlu0 %953
    %955 = vrot.lane.b32.xlu0 %v30, 48
    %v956 = vpop.permute.xlu0 %955
    %957 = vrot.lane.b32.xlu0 %v31, 48
    %v958 = vpop.permute.xlu0 %957
    %959 = vrot.lane.b32.xlu0 %v32, 48
    %v960 = vpop.permute.xlu0 %959
    %966 = vrot.lane.b32.xlu0 %v475, 64
    %v967 = vpop.permute.xlu0 %966
    %v970 = vsel %vm560, %v945, 0
    %v973 = vsel %vm560, %v946, 0
    %v976 = vsel %vm560, %v947, 0
    %v979 = vsel %vm560, %v948, 0
    %v982 = vsel %vm560, %v949, 0
    %v985 = vsel %vm560, %v950, 0
    %v988 = vsel %vm560, %v951, 0
    %v991 = vsel %vm560, %v952, 0
    %993 = vmatprep.subr.mxu0 0.0
    %994 = vmatpush1.msra.mxu0 %v954
    %995 = vmatprep.subr.mxu0 0.0
    %996 = vmatpush1.msra.mxu0 %v956
    %997 = vmatprep.subr.mxu0 0.0
    %998 = vmatpush1.msra.mxu0 %v958
    %999 = vmatprep.subr.mxu0 0.0
    %1000 = vmatpush1.msra.mxu0 %v960
    %1001 = vmatprep.subr.mxu0 0.0
    %1002 = vmatpush1.msra.mxu0 0.0
    %1003 = vmatprep.subr.mxu0 0.0
    %1004 = vmatpush1.msra.mxu0 0.0
    %1005 = vmatprep.subr.mxu0 0.0
    %1006 = vmatpush1.msra.mxu0 0.0
    %1007 = vmatprep.subr.mxu0 0.0
    %1008 = vmatpush1.msra.mxu0 0.0
    %1009 = vmatprep.subr.mxu0 0.0
    %1010 = vmatpush1.msra.mxu0 0.0
    %1011 = vmatprep.subr.mxu0 0.0
    %1012 = vmatpush1.msra.mxu0 0.0
    %1013 = vmatprep.subr.mxu0 0.0
    %1014 = vmatpush1.msra.mxu0 0.0
    %1015 = vmatprep.subr.mxu0 0.0
    %1016 = vmatpush1.msra.mxu0 0.0
    %1017 = vmatprep.subr.mxu0 0.0
    %1018 = vmatpush1.msra.mxu0 0.0
    %1019 = vmatprep.subr.mxu0 0.0
    %1020 = vmatpush1.msra.mxu0 0.0
    %1021 = vmatprep.subr.mxu0 0.0
    %1022 = vmatpush1.msra.mxu0 0.0
    %1023 = vmatprep.subr.mxu0 0.0
    %1024 = vmatpush1.msra.mxu0 0.0
    %1025 = vmatprep.subr.mxu0 0.0
    %1026 = vmatpush1.msra.mxu0 0.0
    %1027 = vmatprep.subr.mxu0 0.0
    %1028 = vmatpush1.msra.mxu0 0.0
    %1029 = vmatprep.subr.mxu0 0.0
    %1030 = vmatpush1.msra.mxu0 0.0
    %1031 = vmatprep.subr.mxu0 0.0
    %1032 = vmatpush1.msra.mxu0 0.0
    %1033 = vmatprep.subr.mxu0 0.0
    %1034 = vmatpush1.msra.mxu0 0.0
    %1035 = vmatprep.subr.mxu0 0.0
    %1036 = vmatpush1.msra.mxu0 0.0
    %1037 = vmatprep.subr.mxu0 0.0
    %1038 = vmatpush1.msra.mxu0 0.0
    %1039 = vmatprep.subr.mxu0 0.0
    %1040 = vmatpush1.msra.mxu0 0.0
    %1041 = vmatprep.subr.mxu0 0.0
    %1042 = vmatpush1.msra.mxu0 0.0
    %1043 = vmatprep.subr.mxu0 0.0
    %1044 = vmatpush1.msra.mxu0 0.0
    %1045 = vmatprep.subr.mxu0 0.0
    %1046 = vmatpush1.msra.mxu0 0.0
    %1047 = vmatprep.subr.mxu0 0.0
    %1048 = vmatpush1.msra.mxu0 0.0
    %1049 = vmatprep.subr.mxu0 0.0
    %1050 = vmatpush1.msra.mxu0 0.0
    %1051 = vmatprep.subr.mxu0 0.0
    %1052 = vmatpush1.msra.mxu0 0.0
    %1053 = vmatprep.subr.mxu0 0.0
    %1054 = vmatpush1.msra.mxu0 0.0
    %1055 = vmatprep.subr.mxu0 0.0
    %1056 = vmatpush1.msra.mxu0 0.0
    %1057 = vmatprep.mubr.f32.mxu0 0.0
    %1058 = vmatmul.mubr.f32.gmra.mrb[0].mxu0 %v970
    %v1059 = vpop.f32.mrb[0].mxu0
    %v1060 = vadd.f32 %v967, %v1059
    %v1061 = vpop.f32.mrb[0].mxu0
    %1062 = vmatprep.mubr.f32.mxu0 0.0
    %1063 = vmatmul.mubr.f32.gmra.mrb[0].mxu0 %v973
    %v1064 = vpop.f32.mrb[0].mxu0
    %v1065 = vadd.f32 %v967, %v1064
    %v1066 = vpop.f32.mrb[0].mxu0
    %1067 = vmatprep.mubr.f32.mxu0 0.0
    %1068 = vmatmul.mubr.f32.gmra.mrb[0].mxu0 %v976
    %v1069 = vpop.f32.mrb[0].mxu0
    %v1070 = vadd.f32 %v967, %v1069
    %v1071 = vpop.f32.mrb[0].mxu0
    %1072 = vmatprep.mubr.f32.mxu0 0.0
    %1073 = vmatmul.mubr.f32.gmra.mrb[0].mxu0 %v979
    %v1074 = vpop.f32.mrb[0].mxu0
    %v1075 = vadd.f32 %v967, %v1074
    %v1076 = vpop.f32.mrb[0].mxu0
    %1077 = vmatprep.mubr.f32.mxu0 0.0
    %1078 = vmatmul.mubr.f32.gmra.mrb[0].mxu0 %v982
    %v1079 = vpop.f32.mrb[0].mxu0
    %v1080 = vadd.f32 %v967, %v1079
    %v1081 = vpop.f32.mrb[0].mxu0
    %1082 = vmatprep.mubr.f32.mxu0 0.0
    %1083 = vmatmul.mubr.f32.gmra.mrb[0].mxu0 %v985
    %v1084 = vpop.f32.mrb[0].mxu0
    %v1085 = vadd.f32 %v967, %v1084
    %v1086 = vpop.f32.mrb[0].mxu0
    %1087 = vmatprep.mubr.f32.mxu0 0.0
    %1088 = vmatmul.mubr.f32.gmra.mrb[0].mxu0 %v988
    %v1089 = vpop.f32.mrb[0].mxu0
    %v1090 = vadd.f32 %v967, %v1089
    %v1091 = vpop.f32.mrb[0].mxu0
    %1092 = vmatprep.mubr.f32.mxu0 0.0
    %1093 = vmatmul.mubr.f32.gmra.mrb[0].mxu0 %v991
    %v1094 = vpop.f32.mrb[0].mxu0
    %v1095 = vadd.f32 %v967, %v1094
    %v1096 = vpop.f32.mrb[0].mxu0
    %1097 = vdwg.mxu0
    %vm1098 = vcmask 31744
    %1099 = vst.msk [vmem:[%s3] sm:$0xff] %vm1098, %v1060
    %1100 = vst.msk [vmem:[%s3 + $0x8] sm:$0xff] %vm1098, %v1065
    %1101 = vst.msk [vmem:[%s3 + $0x10] sm:$0xff] %vm1098, %v1070
    %1102 = vst.msk [vmem:[%s3 + $0x18] sm:$0xff] %vm1098, %v1075
    %1103 = vst.msk [vmem:[%s3 + $0x20] sm:$0xff] %vm1098, %v1080
    %1104 = vst.msk [vmem:[%s3 + $0x28] sm:$0xff] %vm1098, %v1085
    %1105 = vst.msk [vmem:[%s3 + $0x30] sm:$0xff] %vm1098, %v1090
    %1106 = vst.msk [vmem:[%s3 + $0x38] sm:$0xff] %vm1098, %v1095
    // Predicated region
    $region18: #{_rsn_forward.1} parent=1 // pred_check
      _
    $region19: #{_rsn_forward.1} parent=1 // pred_check_branch
      %1108 = sbr.rel (0) target = $region21
    $region20: #{_rsn_forward.1} parent=1 // pred_region
      _
    $region21: #{_rsn_forward.1} parent=1 // pred_fallthru
      _
    // Predicated region
    $region22: #{_rsn_forward.1} parent=1 // pred_check
      _
    $region23: #{_rsn_forward.1} parent=1 // pred_check_branch
      %1110 = sbr.rel (0) target = $region25
    $region24: #{_rsn_forward.1} parent=1 // pred_region
      _
    $region25: #{_rsn_forward.1} parent=1 // pred_fallthru
      _
    %1111 = vsyncpa [#allocation4], 1

</llo_original>
